<compile_context>
chip_gen: v7x
topology: tpu7x:2x2x1
jax: 0.10.0
libtpu: 0.0.40
codegen_flags: <defaults>
</compile_context>

<pallas_src>
import jax
import jax.numpy as jnp
import numpy as np
from jax.experimental import pallas as pl
from jax.experimental.pallas import tpu as pltpu


def _round_up(x, m):
    return (x + m - 1) // m * m


def _cdiv(a, b):
    return (a + b - 1) // b


# ----------------------------------------------------------------------------- kernel
def cls_head_kernel(x_ref, w1_ref, c1_ref, w2_ref, c2_ref, w3_ref, b3_ref, o_ref):
    # Layer 1: Linear (BN scale pre-folded into w1 columns) + folded bias + ReLU.
    h1 = jnp.dot(x_ref[...], w1_ref[...], preferred_element_type=jnp.float32)
    h1 = jnp.maximum(h1 + c1_ref[...], 0.0)
    # Dropout(p=0.5) is identity in eval mode.
    # Layer 2: Linear (BN scale pre-folded into w2 columns) + folded bias + ReLU.
    h2 = jnp.dot(h1.astype(w2_ref.dtype), w2_ref[...],
                 preferred_element_type=jnp.float32)
    h2 = jnp.maximum(h2 + c2_ref[...], 0.0)
    # Layer 3: plain Linear -> lane-padded logits (pad lanes carry a -1e30 bias).
    logits = jnp.dot(h2.astype(w3_ref.dtype), w3_ref[...],
                     preferred_element_type=jnp.float32) + b3_ref[...]
    o_ref[...] = logits.astype(o_ref.dtype)


# ----------------------------------------------------------------------------- wrapper
def _choose_tiling(n, block_rows):
    """Row tile (sublane aligned). For batches > 256 rows keep tm a multiple
    of 256 (full MXU passes) and force >= 2 grid steps so the 'parallel' axis
    really shards across both v7x TensorCores."""
    if n <= 256:
        return _round_up(max(n, 8), 16), 1
    steps = max(2, _cdiv(n, block_rows))
    tm = _round_up(_cdiv(n, steps), 256)
    steps = _cdiv(n, tm)
    return tm, steps


def _resident_spec(shape):
    """Constant block (stays resident in VMEM across grid steps); single
    pipeline buffer since its block index never changes."""
    try:
        return pl.BlockSpec(shape, lambda i: (0, 0), pipeline_mode=pl.Buffered(1))
    except TypeError:  # older BlockSpec without pipeline_mode kwarg
        return pl.BlockSpec(shape, lambda i: (0, 0))


def cls_head_pallas(feat, folded, *, block_rows=2048, out_dtype=None):
    """feat: (N, embed). folded: dict from prepare_cls_head_params.
    Returns lane/row-padded logits of shape (N_pad, 128*k)."""
    w1, c1 = folded["w1"], folded["c1"]
    w2, c2 = folded["w2"], folded["c2"]
    w3, b3 = folded["w3"], folded["b3"]

    feat = feat.astype(w1.dtype)
    n, embed = feat.shape
    h1_dim, h2_dim, ncls_pad = w1.shape[1], w2.shape[1], w3.shape[1]
    out_dtype = feat.dtype if out_dtype is None else out_dtype
    out_itemsize = jnp.dtype(out_dtype).itemsize

    tm, steps = _choose_tiling(n, block_rows)
    n_pad = tm * steps
    if n_pad != n:
        feat = jnp.pad(feat, ((0, n_pad - n), (0, 0)))

    nbytes = lambda a: a.size * a.dtype.itemsize
    flops = 2 * n_pad * (embed * h1_dim + h1_dim * h2_dim + h2_dim * ncls_pad)
    bytes_accessed = (nbytes(feat) + nbytes(w1) + nbytes(w2) + nbytes(w3)
                      + nbytes(c1) + nbytes(c2) + nbytes(b3)
                      + n_pad * ncls_pad * out_itemsize)

    # VMEM estimate: double-buffered feat/out tiles, single-buffered resident
    # weights, f32 intermediates. Only raise the scoped limit when a very big
    # tile would blow past v5e's 16 MiB default.
    vmem_bytes = (2 * tm * embed * feat.dtype.itemsize
                  + 2 * tm * ncls_pad * out_itemsize
                  + nbytes(w1) + nbytes(w2) + nbytes(w3)
                  + nbytes(c1) + nbytes(c2) + nbytes(b3)
                  + tm * (h1_dim + h2_dim) * 4)
    cp_kwargs = dict(dimension_semantics=("parallel",))
    if vmem_bytes > 14 * 1024 * 1024:
        cp_kwargs["vmem_limit_bytes"] = min(int(vmem_bytes * 3 // 2), 64 * 1024 * 1024)

    return pl.pallas_call(
        cls_head_kernel,
        out_shape=jax.ShapeDtypeStruct((n_pad, ncls_pad), out_dtype),
        grid=(steps,),
        in_specs=[
            pl.BlockSpec((tm, embed), lambda i: (i, 0)),   # feat tile
            _resident_spec(w1.shape), _resident_spec(c1.shape),
            _resident_spec(w2.shape), _resident_spec(c2.shape),
            _resident_spec(w3.shape), _resident_spec(b3.shape),
        ],
        out_specs=pl.BlockSpec((tm, ncls_pad), lambda i: (i, 0)),
        compiler_params=pltpu.CompilerParams(**cp_kwargs),
        cost_estimate=pl.CostEstimate(flops=flops, transcendentals=0,
                                      bytes_accessed=bytes_accessed),
    )(feat, w1, c1, w2, c2, w3, b3)


# ----------------------------------------------------------------------------- param folding (do ONCE, cache)
def fold_bn(lin_bias, gamma, beta, running_mean, running_var, eps=1e-5):
    """Fold eval-mode BatchNorm1d + preceding linear bias into (scale, bias)."""
    scale = gamma / jnp.sqrt(running_var + eps)
    bias = beta + (lin_bias - running_mean) * scale
    return scale, bias


def prepare_cls_head_params(params, num_classes, param_dtype=jnp.bfloat16,
                            pad_logit_fill=-1e30):
    """Fold BN into the linears, transpose to (in,out), cast, lane-pad the
    classifier. Call once and reuse across forward calls."""
    s1, c1 = fold_bn(params["b1"], params["g1"], params["be1"],
                     params["rm1"], params["rv1"])
    s2, c2 = fold_bn(params["b2"], params["g2"], params["be2"],
                     params["rm2"], params["rv2"])
    # x @ (W * s) == (x @ W) * s  -> fold BN scale into weight columns.
    w1 = (params["w1"].T * s1[None, :]).astype(param_dtype)
    w2 = (params["w2"].T * s2[None, :]).astype(param_dtype)
    ncls_pad = _round_up(num_classes, 128)
    w3 = jnp.pad(params["w3"].T,
                 ((0, 0), (0, ncls_pad - num_classes))).astype(param_dtype)
    # Pad lanes get a hugely negative bias so the padded logits are safe for
    # downstream argmax/softmax without slicing.
    b3 = jnp.pad(params["b3"].astype(jnp.float32),
                 (0, ncls_pad - num_classes), constant_values=pad_logit_fill)
    row = lambda v: v.reshape(1, -1).astype(jnp.float32)
    folded = dict(w1=w1, c1=row(c1), w2=w2, c2=row(c2), w3=w3, b3=row(b3))
    return jax.device_put(folded)


def default_classifier_forward(feat, folded, num_classes, *,
                               out_dtype=None, block_rows=2048,
                               return_padded=False):
    """Eval-mode cls_head of DefaultClassifier; returns cls_logits.

    return_padded=True returns the lane/row-padded (N_pad, 128) logits as-is
    (pad lanes ~ -1e30), skipping the post-kernel slice pass entirely."""
    logits = cls_head_pallas(feat, folded, block_rows=block_rows,
                             out_dtype=out_dtype)
    if return_padded:
        return logits
    return logits[:feat.shape[0], :num_classes]   # single combined slice


# ----------------------------------------------------------------------------- reference
def reference_forward(feat, params):
    """Pure-jnp reference mirroring PyTorch eval semantics."""
    eps = 1e-5
    x = feat @ params["w1"].T + params["b1"]
    x = (x - params["rm1"]) / jnp.sqrt(params["rv1"] + eps) * params["g1"] + params["be1"]
    x = jnp.maximum(x, 0.0)
    x = x @ params["w2"].T + params["b2"]
    x = (x - params["rm2"]) / jnp.sqrt(params["rv2"] + eps) * params["g2"] + params["be2"]
    x = jnp.maximum(x, 0.0)
    return x @ params["w3"].T + params["b3"]


if __name__ == "__main__":
    num_classes = 40
    backbone_embed_dim = 256

    key = jax.random.PRNGKey(0)
    keys = jax.random.split(key, 12)

    # TODO(synk): backbone (build_model) and criteria (build_criteria) are
    # external configurable modules; we take the backbone feature as input and
    # return cls_logits (inference path without 'category').
    def lin(k, out_dim, in_dim):
        return jax.random.normal(k, (out_dim, in_dim), jnp.float32) / np.sqrt(in_dim)

    params = dict(
        w1=lin(keys[1], 256, backbone_embed_dim),
        b1=jax.random.normal(keys[2], (256,), jnp.float32) * 0.01,
        g1=jnp.ones((256,), jnp.float32),
        be1=jnp.zeros((256,), jnp.float32),
        rm1=jax.random.normal(keys[3], (256,), jnp.float32) * 0.1,
        rv1=jnp.ones((256,), jnp.float32) + jax.random.uniform(keys[4], (256,)) * 0.1,
        w2=lin(keys[5], 128, 256),
        b2=jax.random.normal(keys[6], (128,), jnp.float32) * 0.01,
        g2=jnp.ones((128,), jnp.float32),
        be2=jnp.zeros((128,), jnp.float32),
        rm2=jax.random.normal(keys[7], (128,), jnp.float32) * 0.1,
        rv2=jnp.ones((128,), jnp.float32) + jax.random.uniform(keys[8], (128,)) * 0.1,
        w3=lin(keys[9], num_classes, 128),
        b3=jax.random.normal(keys[10], (num_classes,), jnp.float32) * 0.01,
    )

    # ---- small batch, f32 folded weights: tight check of the kernel math ----
    batch = 12  # not a multiple of the sublane tile -> exercises row padding
    feat = jax.random.normal(keys[0], (batch, backbone_embed_dim), jnp.float32)
    ref = reference_forward(feat, params)

    folded_f32 = prepare_cls_head_params(params, num_classes,
                                         param_dtype=jnp.float32)
    logits_f32 = jax.block_until_ready(
        default_classifier_forward(feat, folded_f32, num_classes,
                                   out_dtype=jnp.float32))
    assert logits_f32.shape == (batch, num_classes)
    np.testing.assert_allclose(np.asarray(logits_f32), np.asarray(ref),
                               rtol=1e-4, atol=1e-4)

    # ---- bigger batch, bf16 fast path: multi-step grid, padded bf16 output --
    batch2 = 384  # > 256 -> >= 2 grid steps (megacore sharding path)
    feat2 = jax.random.normal(keys[11], (batch2, backbone_embed_dim), jnp.float32)
    ref2 = reference_forward(feat2, params)

    folded_bf16 = prepare_cls_head_params(params, num_classes)  # cached once
    padded = jax.block_until_ready(
        default_classifier_forward(feat2, folded_bf16, num_classes,
                                   return_padded=True))
    assert padded.dtype == jnp.bfloat16
    assert padded.shape[1] == 128 and padded.shape[0] >= batch2
    padded_np = np.asarray(padded).astype(np.float32)
    # Pad lanes are hugely negative -> safe for downstream softmax/argmax.
    assert np.all(padded_np[:, num_classes:] < -1e29)
    np.testing.assert_allclose(padded_np[:batch2, :num_classes],
                               np.asarray(ref2), rtol=1e-1, atol=1e-1)

    print("KERNEL_OK")
</pallas_src>

<mosaic_0001>
module attributes {stable_mosaic.version = 11 : i64} {
  func.func @cls_head_kernel(%arg0: i32, %arg1: memref<16x256xf32, #tpu.memory_space<vmem>>, %arg2: memref<256x256xf32, #tpu.memory_space<vmem>>, %arg3: memref<1x256xf32, #tpu.memory_space<vmem>>, %arg4: memref<256x128xf32, #tpu.memory_space<vmem>>, %arg5: memref<1x128xf32, #tpu.memory_space<vmem>>, %arg6: memref<128x128xf32, #tpu.memory_space<vmem>>, %arg7: memref<1x128xf32, #tpu.memory_space<vmem>>, %arg8: memref<16x128xf32, #tpu.memory_space<vmem>>) attributes {dimension_semantics = [#tpu.dimension_semantics<parallel>], iteration_bounds = array<i64: 1>, scalar_prefetch = 0 : i64, scratch_operands = 0 : i64, tpu.core_type = #tpu.core_type<tc>, window_params = [{transform_indices = @transform_0, window_bounds = array<i64: 16, 256>}, {pipeline_mode = #tpu.pipeline_mode<synchronous>, transform_indices = @transform_1, window_bounds = array<i64: 256, 256>}, {pipeline_mode = #tpu.pipeline_mode<synchronous>, transform_indices = @transform_2, window_bounds = array<i64: 1, 256>}, {pipeline_mode = #tpu.pipeline_mode<synchronous>, transform_indices = @transform_3, window_bounds = array<i64: 256, 128>}, {pipeline_mode = #tpu.pipeline_mode<synchronous>, transform_indices = @transform_4, window_bounds = array<i64: 1, 128>}, {pipeline_mode = #tpu.pipeline_mode<synchronous>, transform_indices = @transform_5, window_bounds = array<i64: 128, 128>}, {pipeline_mode = #tpu.pipeline_mode<synchronous>, transform_indices = @transform_6, window_bounds = array<i64: 1, 128>}, {transform_indices = @transform_7, window_bounds = array<i64: 16, 128>}]} {
    %c0 = arith.constant 0 : index
    %c0_0 = arith.constant 0 : index
    %0 = vector.load %arg1[%c0, %c0_0] : memref<16x256xf32, #tpu.memory_space<vmem>>, vector<16x256xf32>
    %c0_1 = arith.constant 0 : index
    %c0_2 = arith.constant 0 : index
    %1 = vector.load %arg2[%c0_1, %c0_2] : memref<256x256xf32, #tpu.memory_space<vmem>>, vector<256x256xf32>
    %cst = arith.constant dense<0.000000e+00> : vector<16x256xf32>
    %2 = tpu.matmul %0, %1, %cst {dimension_numbers = #tpu.dot_dimension_numbers<[1], [0], [0], [1], [0, 0, 1, 1], [], []>} : vector<16x256xf32>, vector<256x256xf32>, vector<16x256xf32> -> vector<16x256xf32>
    %c0_3 = arith.constant 0 : index
    %c0_4 = arith.constant 0 : index
    %3 = vector.load %arg3[%c0_3, %c0_4] : memref<1x256xf32, #tpu.memory_space<vmem>>, vector<1x256xf32>
    %4 = vector.broadcast %3 : vector<1x256xf32> to vector<16x256xf32>
    %5 = arith.addf %2, %4 : vector<16x256xf32>
    %cst_5 = arith.constant 0.000000e+00 : f32
    %6 = vector.broadcast %cst_5 : f32 to vector<16x256xf32>
    %7 = arith.maximumf %5, %6 : vector<16x256xf32>
    %c0_6 = arith.constant 0 : index
    %c0_7 = arith.constant 0 : index
    %8 = vector.load %arg4[%c0_6, %c0_7] : memref<256x128xf32, #tpu.memory_space<vmem>>, vector<256x128xf32>
    %cst_8 = arith.constant dense<0.000000e+00> : vector<16x128xf32>
    %9 = tpu.matmul %7, %8, %cst_8 {dimension_numbers = #tpu.dot_dimension_numbers<[1], [0], [0], [1], [0, 0, 1, 1], [], []>} : vector<16x256xf32>, vector<256x128xf32>, vector<16x128xf32> -> vector<16x128xf32>
    %c0_9 = arith.constant 0 : index
    %c0_10 = arith.constant 0 : index
    %10 = vector.load %arg5[%c0_9, %c0_10] : memref<1x128xf32, #tpu.memory_space<vmem>>, vector<1x128xf32>
    %11 = vector.broadcast %10 : vector<1x128xf32> to vector<16x128xf32>
    %12 = arith.addf %9, %11 : vector<16x128xf32>
    %cst_11 = arith.constant 0.000000e+00 : f32
    %13 = vector.broadcast %cst_11 : f32 to vector<16x128xf32>
    %14 = arith.maximumf %12, %13 : vector<16x128xf32>
    %c0_12 = arith.constant 0 : index
    %c0_13 = arith.constant 0 : index
    %15 = vector.load %arg6[%c0_12, %c0_13] : memref<128x128xf32, #tpu.memory_space<vmem>>, vector<128x128xf32>
    %cst_14 = arith.constant dense<0.000000e+00> : vector<16x128xf32>
    %16 = tpu.matmul %14, %15, %cst_14 {dimension_numbers = #tpu.dot_dimension_numbers<[1], [0], [0], [1], [0, 0, 1, 1], [], []>} : vector<16x128xf32>, vector<128x128xf32>, vector<16x128xf32> -> vector<16x128xf32>
    %c0_15 = arith.constant 0 : index
    %c0_16 = arith.constant 0 : index
    %17 = vector.load %arg7[%c0_15, %c0_16] : memref<1x128xf32, #tpu.memory_space<vmem>>, vector<1x128xf32>
    %18 = vector.broadcast %17 : vector<1x128xf32> to vector<16x128xf32>
    %19 = arith.addf %16, %18 : vector<16x128xf32>
    %c0_17 = arith.constant 0 : index
    %c0_18 = arith.constant 0 : index
    %20 = vector.load %arg8[%c0_17, %c0_18] : memref<16x128xf32, #tpu.memory_space<vmem>>, vector<16x128xf32>
    tpu.vector_store %arg8[%c0_17, %c0_18], %19 {strides = array<i32>} : memref<16x128xf32, #tpu.memory_space<vmem>>, vector<16x128xf32>,
    return
  }
  func.func @transform_0(%arg0: i32) -> (i32, i32) {
    %c0_i32 = arith.constant 0 : i32
    %c0_i32_0 = arith.constant 0 : i32
    return %arg0, %c0_i32 : i32, i32
  }
  func.func @transform_1(%arg0: i32) -> (i32, i32) {
    %c0_i32 = arith.constant 0 : i32
    %c0_i32_0 = arith.constant 0 : i32
    %c0_i32_1 = arith.constant 0 : i32
    return %c0_i32, %c0_i32_0 : i32, i32
  }
  func.func @transform_2(%arg0: i32) -> (i32, i32) {
    %c0_i32 = arith.constant 0 : i32
    %c0_i32_0 = arith.constant 0 : i32
    %c0_i32_1 = arith.constant 0 : i32
    return %c0_i32, %c0_i32_0 : i32, i32
  }
  func.func @transform_3(%arg0: i32) -> (i32, i32) {
    %c0_i32 = arith.constant 0 : i32
    %c0_i32_0 = arith.constant 0 : i32
    %c0_i32_1 = arith.constant 0 : i32
    return %c0_i32, %c0_i32_0 : i32, i32
  }
  func.func @transform_4(%arg0: i32) -> (i32, i32) {
    %c0_i32 = arith.constant 0 : i32
    %c0_i32_0 = arith.constant 0 : i32
    %c0_i32_1 = arith.constant 0 : i32
    return %c0_i32, %c0_i32_0 : i32, i32
  }
  func.func @transform_5(%arg0: i32) -> (i32, i32) {
    %c0_i32 = arith.constant 0 : i32
    %c0_i32_0 = arith.constant 0 : i32
    %c0_i32_1 = arith.constant 0 : i32
    return %c0_i32, %c0_i32_0 : i32, i32
  }
  func.func @transform_6(%arg0: i32) -> (i32, i32) {
    %c0_i32 = arith.constant 0 : i32
    %c0_i32_0 = arith.constant 0 : i32
    %c0_i32_1 = arith.constant 0 : i32
    return %c0_i32, %c0_i32_0 : i32, i32
  }
  func.func @transform_7(%arg0: i32) -> (i32, i32) {
    %c0_i32 = arith.constant 0 : i32
    %c0_i32_0 = arith.constant 0 : i32
    return %arg0, %c0_i32 : i32, i32
  }
}

</mosaic_0001>

<llo_original>
// kernel: tpu_custom_call.1
$region0: #{tpu_custom_call.1}
  #allocation0 [shape = 'u32[]', space=smem, size = 0x4, offset = 0x4, fixed_abs, tag = 'smem constant byte address 0x4 - core index']
  #allocation1 [shape = 'u32[144,128]{1,0:T(1,128)}', space=vmem, size = 0x12000, scoped, tag = 'internal scratch']
  %s0 = inlined_call_operand.hbm [shape: f32[16,256], index: 0, kind: input, shape index: {}]
  %s1 = inlined_call_operand.hbm [shape: f32[256,256], index: 1, kind: input, shape index: {}]
  %s2 = inlined_call_operand.vmem [shape: f32[1,256], index: 2, kind: input, shape index: {}]
  %s3 = inlined_call_operand.hbm [shape: f32[256,128], index: 3, kind: input, shape index: {}]
  %s4 = inlined_call_operand.vmem [shape: f32[1,128], index: 4, kind: input, shape index: {}]
  %s5 = inlined_call_operand.hbm [shape: f32[128,128], index: 5, kind: input, shape index: {}]
  %s6 = inlined_call_operand.vmem [shape: f32[1,128], index: 6, kind: input, shape index: {}]
  %s7 = inlined_call_operand.hbm [shape: f32[16,128], index: 7, kind: output, shape index: {}]
  %s8 = sld [smem:[#allocation0]]
  $region54: #{tpu_custom_call.1} parent=0
    _
  %s10 = ssub.s32 1, %s8
  %s11 = scalar_select 0, %s10, %s8
  $region1: #{tpu_custom_call.1} parent=0
    #allocation2 [shape = 'u8[16384]{0}', space=vmem, size = 0x4000, scoped, tag = 'input window, operand 0, single buffered']
    #allocation3 [shape = 's32[1]{0}', space=sflag, size = 0x4, scoped, tag = 'scoped memory for tpu_custom_call.1']
    #allocation4 [shape = 's32[1]{0}', space=sflag, size = 0x4, scoped, tag = 'scoped memory for tpu_custom_call.1']
    #allocation5 [shape = 'u8[262144]{0}', space=vmem, size = 0x40000, scoped, tag = 'input window, operand 1, single buffered']
    #allocation6 [shape = 's32[1]{0}', space=sflag, size = 0x4, scoped, tag = 'scoped memory for tpu_custom_call.1']
    #allocation7 [shape = 'u8[131072]{0}', space=vmem, size = 0x20000, scoped, tag = 'input window, operand 3, single buffered']
    #allocation8 [shape = 'u8[65536]{0}', space=vmem, size = 0x10000, scoped, tag = 'input window, operand 5, single buffered']
    #allocation9 [shape = 's32[1]{0}', space=sflag, size = 0x4, scoped, tag = 'scoped memory for tpu_custom_call.1']
    #allocation10 [shape = 'u8[8192]{0}', space=vmem, size = 0x2000, scoped, tag = 'output window, operand 0, single buffered']
    %12 = vsyncpa [#allocation3], 0
    %13 = vsyncpa [#allocation6], 0
    %14 = vsyncpa [#allocation9], 0
    %15 = vsyncpa [#allocation4], 0
    // Predicated region
    $region2: #{tpu_custom_call.1} parent=1 // pred_check
      _
    $region3: #{tpu_custom_call.1} parent=1 // pred_check_branch
      %17 = sbr.rel (0) target = $region5
    $region4: #{tpu_custom_call.1} parent=1 // pred_region
      %s19 = ssub.s32 512, 512
      %20 = vsyncadd [#allocation3], %s19
      %s21 = sshll.u32 [#allocation2], 4
      %s22 = int_to_ptr.vmem [resolvable:$true] %s21
      %27 = dma.hbm_to_vmem [thread:$0]  %s0, 512, %s22, [#allocation3], 256, 256, 16
    $region5: #{tpu_custom_call.1} parent=1 // pred_fallthru
      _
    // Predicated region
    $region6: #{tpu_custom_call.1} parent=1 // pred_check
      _
    $region7: #{tpu_custom_call.1} parent=1 // pred_check_branch
      %29 = sbr.rel (0) target = $region9
    $region8: #{tpu_custom_call.1} parent=1 // pred_region
      %s31 = ssub.s32 8192, 8192
      %32 = vsyncadd [#allocation6], %s31
      %s33 = sshll.u32 [#allocation5], 4
      %s34 = int_to_ptr.vmem [resolvable:$true] %s33
      %39 = dma.hbm_to_vmem [thread:$0]  %s1, 8192, %s34, [#allocation6], 256, 256, 16
    $region9: #{tpu_custom_call.1} parent=1 // pred_fallthru
      _
    // Predicated region
    $region10: #{tpu_custom_call.1} parent=1 // pred_check
      _
    $region11: #{tpu_custom_call.1} parent=1 // pred_check_branch
      %41 = sbr.rel (0) target = $region13
    $region12: #{tpu_custom_call.1} parent=1 // pred_region
      _
    $region13: #{tpu_custom_call.1} parent=1 // pred_fallthru
      _
    // Predicated region
    $region14: #{tpu_custom_call.1} parent=1 // pred_check
      _
    $region15: #{tpu_custom_call.1} parent=1 // pred_check_branch
      %43 = sbr.rel (0) target = $region17
    $region16: #{tpu_custom_call.1} parent=1 // pred_region
      %s45 = ssub.s32 4096, 4096
      %46 = vsyncadd [#allocation6], %s45
      %s47 = sshll.u32 [#allocation7], 4
      %s48 = int_to_ptr.vmem [resolvable:$true] %s47
      %53 = dma.hbm_to_vmem [thread:$0]  %s3, 4096, %s48, [#allocation6], 128, 128, 8
    $region17: #{tpu_custom_call.1} parent=1 // pred_fallthru
      _
    // Predicated region
    $region18: #{tpu_custom_call.1} parent=1 // pred_check
      _
    $region19: #{tpu_custom_call.1} parent=1 // pred_check_branch
      %55 = sbr.rel (0) target = $region21
    $region20: #{tpu_custom_call.1} parent=1 // pred_region
      _
    $region21: #{tpu_custom_call.1} parent=1 // pred_fallthru
      _
    // Predicated region
    $region22: #{tpu_custom_call.1} parent=1 // pred_check
      _
    $region23: #{tpu_custom_call.1} parent=1 // pred_check_branch
      %57 = sbr.rel (0) target = $region25
    $region24: #{tpu_custom_call.1} parent=1 // pred_region
      %s59 = ssub.s32 2048, 2048
      %60 = vsyncadd [#allocation9], %s59
      %s61 = sshll.u32 [#allocation8], 4
      %s62 = int_to_ptr.vmem [resolvable:$true] %s61
      %67 = dma.hbm_to_vmem [thread:$0]  %s5, 2048, %s62, [#allocation9], 128, 128, 8
    $region25: #{tpu_custom_call.1} parent=1 // pred_fallthru
      _
    // Predicated region
    $region26: #{tpu_custom_call.1} parent=1 // pred_check
      _
    $region27: #{tpu_custom_call.1} parent=1 // pred_check_branch
      %69 = sbr.rel (0) target = $region29
    $region28: #{tpu_custom_call.1} parent=1 // pred_region
      _
    $region29: #{tpu_custom_call.1} parent=1 // pred_fallthru
      _
    // Predicated region
    $region30: #{tpu_custom_call.1} parent=1 // pred_check
      _
    $region31: #{tpu_custom_call.1} parent=1 // pred_check_branch
      %71 = sbr.rel (0) target = $region33
    $region32: #{tpu_custom_call.1} parent=1 // pred_region
      %72 = dma.done [#allocation3], 512
    $region33: #{tpu_custom_call.1} parent=1 // pred_fallthru
      _
    // Predicated region
    $region34: #{tpu_custom_call.1} parent=1 // pred_check
      _
    $region35: #{tpu_custom_call.1} parent=1 // pred_check_branch
      %74 = sbr.rel (0) target = $region37
    $region36: #{tpu_custom_call.1} parent=1 // pred_region
      %75 = dma.done [#allocation6], 8192
    $region37: #{tpu_custom_call.1} parent=1 // pred_fallthru
      _
    // Predicated region
    $region38: #{tpu_custom_call.1} parent=1 // pred_check
      _
    $region39: #{tpu_custom_call.1} parent=1 // pred_check_branch
      %77 = sbr.rel (0) target = $region41
    $region40: #{tpu_custom_call.1} parent=1 // pred_region
      %78 = dma.done [#allocation6], 4096
    $region41: #{tpu_custom_call.1} parent=1 // pred_fallthru
      _
    // Predicated region
    $region42: #{tpu_custom_call.1} parent=1 // pred_check
      _
    $region43: #{tpu_custom_call.1} parent=1 // pred_check_branch
      %80 = sbr.rel (0) target = $region45
    $region44: #{tpu_custom_call.1} parent=1 // pred_region
      %81 = dma.done [#allocation9], 2048
    $region45: #{tpu_custom_call.1} parent=1 // pred_fallthru
      _
    %v82 = vld [vmem:[#allocation2] sm:$0xff]
    %v83 = vld [vmem:[#allocation2 + $0x8] sm:$0xff]
    %v84 = vld [vmem:[#allocation2 + $0x10] sm:$0xff]
    %v85 = vld [vmem:[#allocation2 + $0x18] sm:$0xff]
    %v86 = vld [vmem:[#allocation5] sm:$0xff]
    %v87 = vld [vmem:[#allocation5 + $0x8] sm:$0xff]
    %v88 = vld [vmem:[#allocation5 + $0x10] sm:$0xff]
    %v89 = vld [vmem:[#allocation5 + $0x18] sm:$0xff]
    %v90 = vld [vmem:[#allocation5 + $0x20] sm:$0xff]
    %v91 = vld [vmem:[#allocation5 + $0x28] sm:$0xff]
    %v92 = vld [vmem:[#allocation5 + $0x30] sm:$0xff]
    %v93 = vld [vmem:[#allocation5 + $0x38] sm:$0xff]
    %v94 = vld [vmem:[#allocation5 + $0x40] sm:$0xff]
    %v95 = vld [vmem:[#allocation5 + $0x48] sm:$0xff]
    %v96 = vld [vmem:[#allocation5 + $0x50] sm:$0xff]
    %v97 = vld [vmem:[#allocation5 + $0x58] sm:$0xff]
    %v98 = vld [vmem:[#allocation5 + $0x60] sm:$0xff]
    %v99 = vld [vmem:[#allocation5 + $0x68] sm:$0xff]
    %v100 = vld [vmem:[#allocation5 + $0x70] sm:$0xff]
    %v101 = vld [vmem:[#allocation5 + $0x78] sm:$0xff]
    %v102 = vld [vmem:[#allocation5 + $0x80] sm:$0xff]
    %v103 = vld [vmem:[#allocation5 + $0x88] sm:$0xff]
    %v104 = vld [vmem:[#allocation5 + $0x90] sm:$0xff]
    %v105 = vld [vmem:[#allocation5 + $0x98] sm:$0xff]
    %v106 = vld [vmem:[#allocation5 + $0xa0] sm:$0xff]
    %v107 = vld [vmem:[#allocation5 + $0xa8] sm:$0xff]
    %v108 = vld [vmem:[#allocation5 + $0xb0] sm:$0xff]
    %v109 = vld [vmem:[#allocation5 + $0xb8] sm:$0xff]
    %v110 = vld [vmem:[#allocation5 + $0xc0] sm:$0xff]
    %v111 = vld [vmem:[#allocation5 + $0xc8] sm:$0xff]
    %v112 = vld [vmem:[#allocation5 + $0xd0] sm:$0xff]
    %v113 = vld [vmem:[#allocation5 + $0xd8] sm:$0xff]
    %v114 = vld [vmem:[#allocation5 + $0xe0] sm:$0xff]
    %v115 = vld [vmem:[#allocation5 + $0xe8] sm:$0xff]
    %v116 = vld [vmem:[#allocation5 + $0xf0] sm:$0xff]
    %v117 = vld [vmem:[#allocation5 + $0xf8] sm:$0xff]
    %v118 = vld [vmem:[#allocation5 + $0x100] sm:$0xff]
    %v119 = vld [vmem:[#allocation5 + $0x108] sm:$0xff]
    %v120 = vld [vmem:[#allocation5 + $0x110] sm:$0xff]
    %v121 = vld [vmem:[#allocation5 + $0x118] sm:$0xff]
    %v122 = vld [vmem:[#allocation5 + $0x120] sm:$0xff]
    %v123 = vld [vmem:[#allocation5 + $0x128] sm:$0xff]
    %v124 = vld [vmem:[#allocation5 + $0x130] sm:$0xff]
    %v125 = vld [vmem:[#allocation5 + $0x138] sm:$0xff]
    %v126 = vld [vmem:[#allocation5 + $0x140] sm:$0xff]
    %v127 = vld [vmem:[#allocation5 + $0x148] sm:$0xff]
    %v128 = vld [vmem:[#allocation5 + $0x150] sm:$0xff]
    %v129 = vld [vmem:[#allocation5 + $0x158] sm:$0xff]
    %v130 = vld [vmem:[#allocation5 + $0x160] sm:$0xff]
    %v131 = vld [vmem:[#allocation5 + $0x168] sm:$0xff]
    %v132 = vld [vmem:[#allocation5 + $0x170] sm:$0xff]
    %v133 = vld [vmem:[#allocation5 + $0x178] sm:$0xff]
    %v134 = vld [vmem:[#allocation5 + $0x180] sm:$0xff]
    %v135 = vld [vmem:[#allocation5 + $0x188] sm:$0xff]
    %v136 = vld [vmem:[#allocation5 + $0x190] sm:$0xff]
    %v137 = vld [vmem:[#allocation5 + $0x198] sm:$0xff]
    %v138 = vld [vmem:[#allocation5 + $0x1a0] sm:$0xff]
    %v139 = vld [vmem:[#allocation5 + $0x1a8] sm:$0xff]
    %v140 = vld [vmem:[#allocation5 + $0x1b0] sm:$0xff]
    %v141 = vld [vmem:[#allocation5 + $0x1b8] sm:$0xff]
    %v142 = vld [vmem:[#allocation5 + $0x1c0] sm:$0xff]
    %v143 = vld [vmem:[#allocation5 + $0x1c8] sm:$0xff]
    %v144 = vld [vmem:[#allocation5 + $0x1d0] sm:$0xff]
    %v145 = vld [vmem:[#allocation5 + $0x1d8] sm:$0xff]
    %v146 = vld [vmem:[#allocation5 + $0x1e0] sm:$0xff]
    %v147 = vld [vmem:[#allocation5 + $0x1e8] sm:$0xff]
    %v148 = vld [vmem:[#allocation5 + $0x1f0] sm:$0xff]
    %v149 = vld [vmem:[#allocation5 + $0x1f8] sm:$0xff]
    %v150 = vld [vmem:[%s2] sm:$0x3]
    %v152 = vlaneseq
    %v153 = vshrl.u32 %v152, 7
    %v154 = vsub.s32 0, %v153
    %v155 = vrot.slane %v150, %v154
    %v156 = vlaneseq
    %v157 = vshrl.u32 %v156, 7
    %v158 = vsub.s32 1, %v157
    %v159 = vrot.slane %v150, %v158
    %162 = vmatprep.subr.mxu0 %v87
    %163 = vmatpush1.msra.mxu0 %v86
    %164 = vmatprep.subr.mxu0 %v89
    %165 = vmatpush1.msra.mxu0 %v88
    %166 = vmatprep.subr.mxu0 %v91
    %167 = vmatpush1.msra.mxu0 %v90
    %168 = vmatprep.subr.mxu0 %v93
    %169 = vmatpush1.msra.mxu0 %v92
    %170 = vmatprep.subr.mxu0 %v95
    %171 = vmatpush1.msra.mxu0 %v94
    %172 = vmatprep.subr.mxu0 %v97
    %173 = vmatpush1.msra.mxu0 %v96
    %174 = vmatprep.subr.mxu0 %v99
    %175 = vmatpush1.msra.mxu0 %v98
    %176 = vmatprep.subr.mxu0 %v101
    %177 = vmatpush1.msra.mxu0 %v100
    %178 = vmatprep.subr.mxu0 %v103
    %179 = vmatpush1.msra.mxu0 %v102
    %180 = vmatprep.subr.mxu0 %v105
    %181 = vmatpush1.msra.mxu0 %v104
    %182 = vmatprep.subr.mxu0 %v107
    %183 = vmatpush1.msra.mxu0 %v106
    %184 = vmatprep.subr.mxu0 %v109
    %185 = vmatpush1.msra.mxu0 %v108
    %186 = vmatprep.subr.mxu0 %v111
    %187 = vmatpush1.msra.mxu0 %v110
    %188 = vmatprep.subr.mxu0 %v113
    %189 = vmatpush1.msra.mxu0 %v112
    %190 = vmatprep.subr.mxu0 %v115
    %191 = vmatpush1.msra.mxu0 %v114
    %192 = vmatprep.subr.mxu0 %v117
    %193 = vmatpush1.msra.mxu0 %v116
    %194 = vmatprep.subr.mxu0 %v119
    %195 = vmatpush1.msra.mxu0 %v118
    %196 = vmatprep.subr.mxu0 %v121
    %197 = vmatpush1.msra.mxu0 %v120
    %198 = vmatprep.subr.mxu0 %v123
    %199 = vmatpush1.msra.mxu0 %v122
    %200 = vmatprep.subr.mxu0 %v125
    %201 = vmatpush1.msra.mxu0 %v124
    %202 = vmatprep.subr.mxu0 %v127
    %203 = vmatpush1.msra.mxu0 %v126
    %204 = vmatprep.subr.mxu0 %v129
    %205 = vmatpush1.msra.mxu0 %v128
    %206 = vmatprep.subr.mxu0 %v131
    %207 = vmatpush1.msra.mxu0 %v130
    %208 = vmatprep.subr.mxu0 %v133
    %209 = vmatpush1.msra.mxu0 %v132
    %210 = vmatprep.subr.mxu0 %v135
    %211 = vmatpush1.msra.mxu0 %v134
    %212 = vmatprep.subr.mxu0 %v137
    %213 = vmatpush1.msra.mxu0 %v136
    %214 = vmatprep.subr.mxu0 %v139
    %215 = vmatpush1.msra.mxu0 %v138
    %216 = vmatprep.subr.mxu0 %v141
    %217 = vmatpush1.msra.mxu0 %v140
    %218 = vmatprep.subr.mxu0 %v143
    %219 = vmatpush1.msra.mxu0 %v142
    %220 = vmatprep.subr.mxu0 %v145
    %221 = vmatpush1.msra.mxu0 %v144
    %222 = vmatprep.subr.mxu0 %v147
    %223 = vmatpush1.msra.mxu0 %v146
    %224 = vmatprep.subr.mxu0 %v149
    %225 = vmatpush1.msra.mxu0 %v148
    %226 = vmatprep.mubr.f32.mxu0 %v83
    %227 = vmatmul.mubr.f32.gmra.mrb[0].mxu0 %v82
    %v228 = vpop.f32.mrb[0].mxu0
    %v229 = vadd.f32 %v155, %v228
    %v230 = vpop.f32.mrb[0].mxu0
    %v231 = vadd.f32 %v159, %v230
    %232 = vmatprep.mubr.f32.mxu0 %v85
    %233 = vmatmul.mubr.f32.gmra.mrb[0].mxu0 %v84
    %v234 = vpop.f32.mrb[0].mxu0
    %v235 = vadd.f32 %v155, %v234
    %v236 = vpop.f32.mrb[0].mxu0
    %v237 = vadd.f32 %v159, %v236
    %238 = vdwg.mxu0
    %v239 = vmax.f32 %v229, 0.0
    %v240 = vmax.f32 %v231, 0.0
    %v241 = vmax.f32 %v235, 0.0
    %v242 = vmax.f32 %v237, 0.0
    %v243 = vld [vmem:[#allocation7] sm:$0xff]
    %v244 = vld [vmem:[#allocation7 + $0x8] sm:$0xff]
    %v245 = vld [vmem:[#allocation7 + $0x10] sm:$0xff]
    %v246 = vld [vmem:[#allocation7 + $0x18] sm:$0xff]
    %v247 = vld [vmem:[#allocation7 + $0x20] sm:$0xff]
    %v248 = vld [vmem:[#allocation7 + $0x28] sm:$0xff]
    %v249 = vld [vmem:[#allocation7 + $0x30] sm:$0xff]
    %v250 = vld [vmem:[#allocation7 + $0x38] sm:$0xff]
    %v251 = vld [vmem:[#allocation7 + $0x40] sm:$0xff]
    %v252 = vld [vmem:[#allocation7 + $0x48] sm:$0xff]
    %v253 = vld [vmem:[#allocation7 + $0x50] sm:$0xff]
    %v254 = vld [vmem:[#allocation7 + $0x58] sm:$0xff]
    %v255 = vld [vmem:[#allocation7 + $0x60] sm:$0xff]
    %v256 = vld [vmem:[#allocation7 + $0x68] sm:$0xff]
    %v257 = vld [vmem:[#allocation7 + $0x70] sm:$0xff]
    %v258 = vld [vmem:[#allocation7 + $0x78] sm:$0xff]
    %v259 = vld [vmem:[#allocation7 + $0x80] sm:$0xff]
    %v260 = vld [vmem:[#allocation7 + $0x88] sm:$0xff]
    %v261 = vld [vmem:[#allocation7 + $0x90] sm:$0xff]
    %v262 = vld [vmem:[#allocation7 + $0x98] sm:$0xff]
    %v263 = vld [vmem:[#allocation7 + $0xa0] sm:$0xff]
    %v264 = vld [vmem:[#allocation7 + $0xa8] sm:$0xff]
    %v265 = vld [vmem:[#allocation7 + $0xb0] sm:$0xff]
    %v266 = vld [vmem:[#allocation7 + $0xb8] sm:$0xff]
    %v267 = vld [vmem:[#allocation7 + $0xc0] sm:$0xff]
    %v268 = vld [vmem:[#allocation7 + $0xc8] sm:$0xff]
    %v269 = vld [vmem:[#allocation7 + $0xd0] sm:$0xff]
    %v270 = vld [vmem:[#allocation7 + $0xd8] sm:$0xff]
    %v271 = vld [vmem:[#allocation7 + $0xe0] sm:$0xff]
    %v272 = vld [vmem:[#allocation7 + $0xe8] sm:$0xff]
    %v273 = vld [vmem:[#allocation7 + $0xf0] sm:$0xff]
    %v274 = vld [vmem:[#allocation7 + $0xf8] sm:$0xff]
    %v275 = vld [vmem:[%s4] sm:$0x1]
    %v277 = vlaneseq
    %v278 = vshrl.u32 %v277, 7
    %v279 = vsub.s32 0, %v278
    %v280 = vrot.slane %v275, %v279
    %282 = vmatprep.subr.mxu0 0.0
    %283 = vmatpush1.msra.mxu0 %v243
    %284 = vmatprep.subr.mxu0 0.0
    %285 = vmatpush1.msra.mxu0 %v244
    %286 = vmatprep.subr.mxu0 0.0
    %287 = vmatpush1.msra.mxu0 %v245
    %288 = vmatprep.subr.mxu0 0.0
    %289 = vmatpush1.msra.mxu0 %v246
    %290 = vmatprep.subr.mxu0 0.0
    %291 = vmatpush1.msra.mxu0 %v247
    %292 = vmatprep.subr.mxu0 0.0
    %293 = vmatpush1.msra.mxu0 %v248
    %294 = vmatprep.subr.mxu0 0.0
    %295 = vmatpush1.msra.mxu0 %v249
    %296 = vmatprep.subr.mxu0 0.0
    %297 = vmatpush1.msra.mxu0 %v250
    %298 = vmatprep.subr.mxu0 0.0
    %299 = vmatpush1.msra.mxu0 %v251
    %300 = vmatprep.subr.mxu0 0.0
    %301 = vmatpush1.msra.mxu0 %v252
    %302 = vmatprep.subr.mxu0 0.0
    %303 = vmatpush1.msra.mxu0 %v253
    %304 = vmatprep.subr.mxu0 0.0
    %305 = vmatpush1.msra.mxu0 %v254
    %306 = vmatprep.subr.mxu0 0.0
    %307 = vmatpush1.msra.mxu0 %v255
    %308 = vmatprep.subr.mxu0 0.0
    %309 = vmatpush1.msra.mxu0 %v256
    %310 = vmatprep.subr.mxu0 0.0
    %311 = vmatpush1.msra.mxu0 %v257
    %312 = vmatprep.subr.mxu0 0.0
    %313 = vmatpush1.msra.mxu0 %v258
    %314 = vmatprep.subr.mxu0 0.0
    %315 = vmatpush1.msra.mxu0 %v259
    %316 = vmatprep.subr.mxu0 0.0
    %317 = vmatpush1.msra.mxu0 %v260
    %318 = vmatprep.subr.mxu0 0.0
    %319 = vmatpush1.msra.mxu0 %v261
    %320 = vmatprep.subr.mxu0 0.0
    %321 = vmatpush1.msra.mxu0 %v262
    %322 = vmatprep.subr.mxu0 0.0
    %323 = vmatpush1.msra.mxu0 %v263
    %324 = vmatprep.subr.mxu0 0.0
    %325 = vmatpush1.msra.mxu0 %v264
    %326 = vmatprep.subr.mxu0 0.0
    %327 = vmatpush1.msra.mxu0 %v265
    %328 = vmatprep.subr.mxu0 0.0
    %329 = vmatpush1.msra.mxu0 %v266
    %330 = vmatprep.subr.mxu0 0.0
    %331 = vmatpush1.msra.mxu0 %v267
    %332 = vmatprep.subr.mxu0 0.0
    %333 = vmatpush1.msra.mxu0 %v268
    %334 = vmatprep.subr.mxu0 0.0
    %335 = vmatpush1.msra.mxu0 %v269
    %336 = vmatprep.subr.mxu0 0.0
    %337 = vmatpush1.msra.mxu0 %v270
    %338 = vmatprep.subr.mxu0 0.0
    %339 = vmatpush1.msra.mxu0 %v271
    %340 = vmatprep.subr.mxu0 0.0
    %341 = vmatpush1.msra.mxu0 %v272
    %342 = vmatprep.subr.mxu0 0.0
    %343 = vmatpush1.msra.mxu0 %v273
    %344 = vmatprep.subr.mxu0 0.0
    %345 = vmatpush1.msra.mxu0 %v274
    %346 = vmatprep.mubr.f32.mxu0 %v240
    %347 = vmatmul.mubr.f32.gmra.mrb[0].mxu0 %v239
    %v348 = vpop.f32.mrb[0].mxu0
    %v349 = vadd.f32 %v280, %v348
    %v350 = vpop.f32.mrb[0].mxu0
    %351 = vmatprep.mubr.f32.mxu0 %v242
    %352 = vmatmul.mubr.f32.gmra.mrb[0].mxu0 %v241
    %v353 = vpop.f32.mrb[0].mxu0
    %v354 = vadd.f32 %v280, %v353
    %v355 = vpop.f32.mrb[0].mxu0
    %356 = vdwg.mxu0
    %v357 = vmax.f32 %v349, 0.0
    %v358 = vmax.f32 %v354, 0.0
    %v359 = vld [vmem:[#allocation8] sm:$0xff]
    %v360 = vld [vmem:[#allocation8 + $0x8] sm:$0xff]
    %v361 = vld [vmem:[#allocation8 + $0x10] sm:$0xff]
    %v362 = vld [vmem:[#allocation8 + $0x18] sm:$0xff]
    %v363 = vld [vmem:[#allocation8 + $0x20] sm:$0xff]
    %v364 = vld [vmem:[#allocation8 + $0x28] sm:$0xff]
    %v365 = vld [vmem:[#allocation8 + $0x30] sm:$0xff]
    %v366 = vld [vmem:[#allocation8 + $0x38] sm:$0xff]
    %v367 = vld [vmem:[#allocation8 + $0x40] sm:$0xff]
    %v368 = vld [vmem:[#allocation8 + $0x48] sm:$0xff]
    %v369 = vld [vmem:[#allocation8 + $0x50] sm:$0xff]
    %v370 = vld [vmem:[#allocation8 + $0x58] sm:$0xff]
    %v371 = vld [vmem:[#allocation8 + $0x60] sm:$0xff]
    %v372 = vld [vmem:[#allocation8 + $0x68] sm:$0xff]
    %v373 = vld [vmem:[#allocation8 + $0x70] sm:$0xff]
    %v374 = vld [vmem:[#allocation8 + $0x78] sm:$0xff]
    %v375 = vld [vmem:[%s6] sm:$0x1]
    %v377 = vlaneseq
    %v378 = vshrl.u32 %v377, 7
    %v379 = vsub.s32 0, %v378
    %v380 = vrot.slane %v375, %v379
    %382 = vmatprep.subr.mxu0 0.0
    %383 = vmatpush1.msra.mxu0 %v359
    %384 = vmatprep.subr.mxu0 0.0
    %385 = vmatpush1.msra.mxu0 %v360
    %386 = vmatprep.subr.mxu0 0.0
    %387 = vmatpush1.msra.mxu0 %v361
    %388 = vmatprep.subr.mxu0 0.0
    %389 = vmatpush1.msra.mxu0 %v362
    %390 = vmatprep.subr.mxu0 0.0
    %391 = vmatpush1.msra.mxu0 %v363
    %392 = vmatprep.subr.mxu0 0.0
    %393 = vmatpush1.msra.mxu0 %v364
    %394 = vmatprep.subr.mxu0 0.0
    %395 = vmatpush1.msra.mxu0 %v365
    %396 = vmatprep.subr.mxu0 0.0
    %397 = vmatpush1.msra.mxu0 %v366
    %398 = vmatprep.subr.mxu0 0.0
    %399 = vmatpush1.msra.mxu0 %v367
    %400 = vmatprep.subr.mxu0 0.0
    %401 = vmatpush1.msra.mxu0 %v368
    %402 = vmatprep.subr.mxu0 0.0
    %403 = vmatpush1.msra.mxu0 %v369
    %404 = vmatprep.subr.mxu0 0.0
    %405 = vmatpush1.msra.mxu0 %v370
    %406 = vmatprep.subr.mxu0 0.0
    %407 = vmatpush1.msra.mxu0 %v371
    %408 = vmatprep.subr.mxu0 0.0
    %409 = vmatpush1.msra.mxu0 %v372
    %410 = vmatprep.subr.mxu0 0.0
    %411 = vmatpush1.msra.mxu0 %v373
    %412 = vmatprep.subr.mxu0 0.0
    %413 = vmatpush1.msra.mxu0 %v374
    %414 = vmatprep.subr.mxu0 0.0
    %415 = vmatpush1.msra.mxu0 0.0
    %416 = vmatprep.subr.mxu0 0.0
    %417 = vmatpush1.msra.mxu0 0.0
    %418 = vmatprep.subr.mxu0 0.0
    %419 = vmatpush1.msra.mxu0 0.0
    %420 = vmatprep.subr.mxu0 0.0
    %421 = vmatpush1.msra.mxu0 0.0
    %422 = vmatprep.subr.mxu0 0.0
    %423 = vmatpush1.msra.mxu0 0.0
    %424 = vmatprep.subr.mxu0 0.0
    %425 = vmatpush1.msra.mxu0 0.0
    %426 = vmatprep.subr.mxu0 0.0
    %427 = vmatpush1.msra.mxu0 0.0
    %428 = vmatprep.subr.mxu0 0.0
    %429 = vmatpush1.msra.mxu0 0.0
    %430 = vmatprep.subr.mxu0 0.0
    %431 = vmatpush1.msra.mxu0 0.0
    %432 = vmatprep.subr.mxu0 0.0
    %433 = vmatpush1.msra.mxu0 0.0
    %434 = vmatprep.subr.mxu0 0.0
    %435 = vmatpush1.msra.mxu0 0.0
    %436 = vmatprep.subr.mxu0 0.0
    %437 = vmatpush1.msra.mxu0 0.0
    %438 = vmatprep.subr.mxu0 0.0
    %439 = vmatpush1.msra.mxu0 0.0
    %440 = vmatprep.subr.mxu0 0.0
    %441 = vmatpush1.msra.mxu0 0.0
    %442 = vmatprep.subr.mxu0 0.0
    %443 = vmatpush1.msra.mxu0 0.0
    %444 = vmatprep.subr.mxu0 0.0
    %445 = vmatpush1.msra.mxu0 0.0
    %446 = vmatprep.mubr.f32.mxu0 0.0
    %447 = vmatmul.mubr.f32.gmra.mrb[0].mxu0 %v357
    %v448 = vpop.f32.mrb[0].mxu0
    %v449 = vadd.f32 %v380, %v448
    %v450 = vpop.f32.mrb[0].mxu0
    %451 = vmatprep.mubr.f32.mxu0 0.0
    %452 = vmatmul.mubr.f32.gmra.mrb[0].mxu0 %v358
    %v453 = vpop.f32.mrb[0].mxu0
    %v454 = vadd.f32 %v380, %v453
    %v455 = vpop.f32.mrb[0].mxu0
    %456 = vdwg.mxu0
    %457 = vst [vmem:[#allocation10] sm:$0xff] %v449
    %458 = vst [vmem:[#allocation10 + $0x8] sm:$0xff] %v454
    // Predicated region
    $region46: #{tpu_custom_call.1} parent=1 // pred_check
      _
    $region47: #{tpu_custom_call.1} parent=1 // pred_check_branch
      %460 = sbr.rel (0) target = $region49
    $region48: #{tpu_custom_call.1} parent=1 // pred_region
      %s462 = ssub.s32 256, 256
      %463 = vsyncadd [#allocation4], %s462
      %s464 = sshll.u32 [#allocation10], 4
      %s465 = int_to_ptr.vmem [resolvable:$true] %s464
      %470 = dma.vmem_to_hbm [thread:$0]  %s465, 256, %s7, [#allocation4], 128, 128, 8
    $region49: #{tpu_custom_call.1} parent=1 // pred_fallthru
      _
    // Predicated region
    $region50: #{tpu_custom_call.1} parent=1 // pred_check
      _
    $region51: #{tpu_custom_call.1} parent=1 // pred_check_branch
      %472 = sbr.rel (0) target = $region53
    $region52: #{tpu_custom_call.1} parent=1 // pred_region
      %473 = dma.done [#allocation4], 256
    $region53: #{tpu_custom_call.1} parent=1 // pred_fallthru
      _
    %474 = vsyncpa [#allocation3], 1
    %475 = vsyncpa [#allocation6], 1
    %476 = vsyncpa [#allocation9], 1
    %477 = vsyncpa [#allocation4], 1

</llo_original>
